<compile_context>
chip_gen: v6e
topology: v6e:2x2x1
jax: 0.10.0
libtpu: 0.0.40
codegen_flags: <defaults>
</compile_context>

<pallas_src>
import functools

import jax
import jax.numpy as jnp
from jax.experimental import pallas as pl
from jax.experimental.pallas import tpu as pltpu


def _make_trunknet_kernel(layer_dims, activation: bool, bf16_act: bool):
    """Fuses all linear layers + activations of TrunkNet in one kernel body."""
    num_layers = len(layer_dims)

    def _act(v, fn):
        if bf16_act:
            # v6e/v7x: EUP has a bf16 path (~2x transcendental throughput).
            # Do not enable on v5e (no bf16 VPU/EUP path).
            return fn(v.astype(jnp.bfloat16)).astype(jnp.float32)
        return fn(v)

    def kernel(x_ref, w_ref, b_ref, out_ref):
        # x_ref  : (block_n, n_dim)          row-major input tile
        # w_ref  : (L, max_out, max_in)      stacked torch-layout weights (padded)
        # b_ref  : (L, max_out, 1)           stacked biases (padded)
        # out_ref: (block_n, out_dim)        row-major output tile

        # First layer: contract over the feature axis of both operands
        # (einsum 'oi,ni->on') -- no transpose of x needed; the result lands in
        # (features, lanes) layout with rows on the 128-lane axis.
        out0, in0 = layer_dims[0]
        w0 = w_ref[0, :out0, :in0]
        b0 = b_ref[0, :out0, :]
        h = jax.lax.dot_general(
            w0, x_ref[...],
            dimension_numbers=(((1,), (1,)), ((), ())),
            preferred_element_type=jnp.float32,
        ) + b0                                               # (out0, block_n) f32
        if num_layers > 1 and activation:
            h = _act(h, jnp.tanh)

        for i in range(1, num_layers):
            out_i, in_i = layer_dims[i]
            w = w_ref[i, :out_i, :in_i]                      # (out_i, in_i)
            b = b_ref[i, :out_i, :]                          # (out_i, 1)
            h = jnp.dot(w, h, preferred_element_type=jnp.float32) + b
            if i < num_layers - 1 and activation:
                h = _act(h, jnp.tanh)

        if activation:
            h = _act(h, jax.nn.sigmoid)

        # Rows back onto the sublane axis for a contiguous row-major HBM store.
        # The XLU (transpose) slot is idle in this kernel, so this is ~free.
        out_ref[...] = jnp.transpose(h).astype(out_ref.dtype)

    return kernel


def _choose_block_n(N: int, max_block: int) -> tuple[int, int]:
    """Pick the row (lane-axis) tile.

    Tiles are multiples of 128 so every in-kernel shape is tile-aligned.
    For N >= 256 the tile is capped at ~N/2 so the grid has at least two
    "parallel" steps (lets v7x shard the axis across both TensorCores).
    Prefers tiles that divide N so no row padding is needed.
    """
    if N <= 128:
        return 128, 128
    half = max(128, (N // 2) // 128 * 128)
    cap = max(128, min(max_block, half))
    for cand in range(cap, 127, -128):            # largest 128-multiple first
        if N % cand == 0:
            return cand, N                        # divides N -> no padding
    return cap, pl.cdiv(N, cap) * cap             # ragged: pad cheap (N, n_dim)


@functools.partial(
    jax.jit, static_argnames=("activation", "max_block_n", "bf16_activations"))
def trunknet_forward(x, weights, biases, *, activation=True, max_block_n=1024,
                     bf16_activations=False):
    """Pallas TrunkNet forward.

    x       : (n_batch, n_point, n_dim)
    weights : tuple of (out_i, in_i) arrays (torch nn.Linear layout)
    biases  : tuple of (out_i,) arrays
    """
    n_batch, n_point, n_dim = x.shape
    num_layers = len(weights)
    layer_dims = tuple((int(w.shape[0]), int(w.shape[1])) for w in weights)
    out_dim = layer_dims[-1][0]

    # Rows stay row-major end to end (no wrapper transposes of x or the output).
    N = n_batch * n_point
    x2d = x.reshape(N, n_dim)

    block_n, N_pad = _choose_block_n(N, max_block_n)
    if N_pad != N:
        x2d = jnp.pad(x2d, ((0, N_pad - N), (0, 0)))        # cheap: (N, n_dim) only

    # Pack all layer parameters into two stacked zero-padded buffers so the
    # grid-invariant parameter traffic is 2 DMAs (fetched once, constant index
    # maps are not re-DMA'd across grid steps) instead of 2L transfers.
    max_out = max(d[0] for d in layer_dims)
    max_in = max(d[1] for d in layer_dims)
    p_dtype = weights[0].dtype
    w_stack = jnp.zeros((num_layers, max_out, max_in), p_dtype)
    b_stack = jnp.zeros((num_layers, max_out, 1), p_dtype)
    for i, (w, b) in enumerate(zip(weights, biases)):
        w_stack = w_stack.at[i, :w.shape[0], :w.shape[1]].set(w)
        b_stack = b_stack.at[i, :b.shape[0], 0].set(b)

    grid = (N_pad // block_n,)

    in_specs = [
        pl.BlockSpec((block_n, n_dim), lambda i: (i, 0)),
        pl.BlockSpec((num_layers, max_out, max_in), lambda i: (0, 0, 0)),
        pl.BlockSpec((num_layers, max_out, 1), lambda i: (0, 0, 0)),
    ]
    out_spec = pl.BlockSpec((block_n, out_dim), lambda i: (i, 0))

    # Advisory cost hint so XLA schedules neighbouring ops around this kernel.
    itemsize = jnp.dtype(x.dtype).itemsize
    flops = 2 * N * sum(o * k for o, k in layer_dims)
    transcendentals = (
        N * (sum(o for o, _ in layer_dims[:-1]) + out_dim) if activation else 0)
    bytes_accessed = (
        N * (n_dim + out_dim) * itemsize
        + int(w_stack.size) * jnp.dtype(p_dtype).itemsize
        + int(b_stack.size) * jnp.dtype(p_dtype).itemsize)

    kernel = _make_trunknet_kernel(layer_dims, activation, bf16_activations)

    out = pl.pallas_call(
        kernel,
        out_shape=jax.ShapeDtypeStruct((N_pad, out_dim), x.dtype),
        grid_spec=pltpu.PrefetchScalarGridSpec(
            num_scalar_prefetch=0,
            grid=grid,
            in_specs=in_specs,
            out_specs=out_spec,
        ),
        compiler_params=pltpu.CompilerParams(
            dimension_semantics=("parallel",),
        ),
        cost_estimate=pl.CostEstimate(
            flops=flops,
            transcendentals=transcendentals,
            bytes_accessed=bytes_accessed,
        ),
    )(x2d, w_stack, b_stack)

    if N_pad != N:
        out = out[:N]
    return out.reshape(n_batch, n_point, out_dim)


def _reference_forward(x, weights, biases, activation=True):
    """Pure-JAX reference matching the PyTorch module exactly."""
    n_batch, n_point, n_dim = x.shape
    h = x.reshape(-1, n_dim)
    num_layers = len(weights)
    for i, (w, b) in enumerate(zip(weights, biases)):
        # torch Linear: y = x W^T + b
        h = jnp.dot(h, w.T, precision=jax.lax.Precision.HIGHEST) + b
        if i < num_layers - 1 and activation:
            h = jnp.tanh(h)
    if activation:
        h = jax.nn.sigmoid(h)
    return h.reshape(n_batch, n_point, -1)


def _init_params(key, layer_size):
    """Deterministic synthetic parameters in torch nn.Linear layout (out, in)."""
    weights, biases = [], []
    for i in range(len(layer_size) - 1):
        key, kw, kb = jax.random.split(key, 3)
        fan_in = layer_size[i]
        bound = 1.0 / (fan_in ** 0.5)
        w = jax.random.uniform(kw, (layer_size[i + 1], layer_size[i]),
                               minval=-bound, maxval=bound, dtype=jnp.float32)
        b = jax.random.uniform(kb, (layer_size[i + 1],),
                               minval=-bound, maxval=bound, dtype=jnp.float32)
        weights.append(w)
        biases.append(b)
    return tuple(weights), tuple(biases)


if __name__ == "__main__":
    key = jax.random.PRNGKey(0)

    layer_size = [3, 32, 32, 16]
    weights, biases = _init_params(key, layer_size)

    # --- small shape consistent with the module: x is (n_batch, n_point, n_dim) ---
    n_batch, n_point, n_dim = 2, 8, layer_size[0]
    key, kx = jax.random.split(key)
    x_small = jax.random.normal(kx, (n_batch, n_point, n_dim), dtype=jnp.float32)

    out = jax.block_until_ready(trunknet_forward(x_small, weights, biases,
                                                 activation=True))
    ref = _reference_forward(x_small, weights, biases, activation=True)
    assert out.shape == (n_batch, n_point, layer_size[-1]), out.shape
    err = float(jnp.max(jnp.abs(out - ref)))
    assert jnp.allclose(out, ref, atol=5e-3, rtol=5e-3), f"max abs err = {err}"

    # --- no-activation path (pure linear stack) ---
    out_na = jax.block_until_ready(trunknet_forward(x_small, weights, biases,
                                                    activation=False))
    ref_na = _reference_forward(x_small, weights, biases, activation=False)
    err_na = float(jnp.max(jnp.abs(out_na - ref_na)))
    assert jnp.allclose(out_na, ref_na, atol=5e-3, rtol=5e-3), \
        f"max abs err (no act) = {err_na}"

    # --- larger case exercising the multi-step (two-TC-friendly) grid path ---
    key, kx2 = jax.random.split(key)
    x_big = jax.random.normal(kx2, (2, 1024, n_dim), dtype=jnp.float32)  # N=2048 -> 2x1024 tiles
    out_big = jax.block_until_ready(
        trunknet_forward(x_big, weights, biases, activation=True))
    ref_big = _reference_forward(x_big, weights, biases, activation=True)
    err_big = float(jnp.max(jnp.abs(out_big - ref_big)))
    assert jnp.allclose(out_big, ref_big, atol=5e-3, rtol=5e-3), \
        f"max abs err (big) = {err_big}"

    # TODO(synk): optional bf16 I/O variant for v5e (HBM-bound) left disabled by default.
    print("KERNEL_OK")
</pallas_src>

<mosaic_0001>
module attributes {stable_mosaic.version = 11 : i64} {
  func.func @kernel(%arg0: i32, %arg1: memref<128x3xf32, #tpu.memory_space<vmem>>, %arg2: memref<3x32x32xf32, #tpu.memory_space<vmem>>, %arg3: memref<3x32x1xf32, #tpu.memory_space<vmem>>, %arg4: memref<128x16xf32, #tpu.memory_space<vmem>>) attributes {dimension_semantics = [#tpu.dimension_semantics<parallel>], iteration_bounds = array<i64: 1>, scalar_prefetch = 0 : i64, scratch_operands = 0 : i64, tpu.core_type = #tpu.core_type<tc>, window_params = [{transform_indices = @transform_0, window_bounds = array<i64: 128, 3>}, {pipeline_mode = #tpu.pipeline_mode<synchronous>, transform_indices = @transform_1, window_bounds = array<i64: 3, 32, 32>}, {pipeline_mode = #tpu.pipeline_mode<synchronous>, transform_indices = @transform_2, window_bounds = array<i64: 3, 32, 1>}, {transform_indices = @transform_3, window_bounds = array<i64: 128, 16>}]} {
    %c0 = arith.constant 0 : index
    %c0_0 = arith.constant 0 : index
    %c0_1 = arith.constant 0 : index
    %0 = vector.load %arg2[%c0, %c0_0, %c0_1] : memref<3x32x32xf32, #tpu.memory_space<vmem>>, vector<1x32x3xf32>
    %1 = vector.shape_cast %0 : vector<1x32x3xf32> to vector<32x3xf32>
    %c0_2 = arith.constant 0 : index
    %c0_3 = arith.constant 0 : index
    %c0_4 = arith.constant 0 : index
    %2 = vector.load %arg3[%c0_2, %c0_3, %c0_4] : memref<3x32x1xf32, #tpu.memory_space<vmem>>, vector<1x32x1xf32>
    %3 = vector.shape_cast %2 : vector<1x32x1xf32> to vector<32x1xf32>
    %c0_5 = arith.constant 0 : index
    %c0_6 = arith.constant 0 : index
    %4 = vector.load %arg1[%c0_5, %c0_6] : memref<128x3xf32, #tpu.memory_space<vmem>>, vector<128x3xf32>
    %cst = arith.constant dense<0.000000e+00> : vector<32x128xf32>
    %5 = tpu.matmul %1, %4, %cst {dimension_numbers = #tpu.dot_dimension_numbers<[1], [1], [0], [0], [0, 0, 1, 0], [], []>} : vector<32x3xf32>, vector<128x3xf32>, vector<32x128xf32> -> vector<32x128xf32>
    %6 = vector.broadcast %3 : vector<32x1xf32> to vector<32x128xf32>
    %7 = arith.addf %5, %6 : vector<32x128xf32>
    %8 = math.tanh %7 : vector<32x128xf32>
    %c1 = arith.constant 1 : index
    %c0_7 = arith.constant 0 : index
    %c0_8 = arith.constant 0 : index
    %9 = vector.load %arg2[%c1, %c0_7, %c0_8] : memref<3x32x32xf32, #tpu.memory_space<vmem>>, vector<1x32x32xf32>
    %10 = vector.shape_cast %9 : vector<1x32x32xf32> to vector<32x32xf32>
    %c1_9 = arith.constant 1 : index
    %c0_10 = arith.constant 0 : index
    %c0_11 = arith.constant 0 : index
    %11 = vector.load %arg3[%c1_9, %c0_10, %c0_11] : memref<3x32x1xf32, #tpu.memory_space<vmem>>, vector<1x32x1xf32>
    %12 = vector.shape_cast %11 : vector<1x32x1xf32> to vector<32x1xf32>
    %cst_12 = arith.constant dense<0.000000e+00> : vector<32x128xf32>
    %13 = tpu.matmul %10, %8, %cst_12 {dimension_numbers = #tpu.dot_dimension_numbers<[1], [0], [0], [1], [0, 0, 1, 1], [], []>} : vector<32x32xf32>, vector<32x128xf32>, vector<32x128xf32> -> vector<32x128xf32>
    %14 = vector.broadcast %12 : vector<32x1xf32> to vector<32x128xf32>
    %15 = arith.addf %13, %14 : vector<32x128xf32>
    %16 = math.tanh %15 : vector<32x128xf32>
    %c2 = arith.constant 2 : index
    %c0_13 = arith.constant 0 : index
    %c0_14 = arith.constant 0 : index
    %17 = vector.load %arg2[%c2, %c0_13, %c0_14] : memref<3x32x32xf32, #tpu.memory_space<vmem>>, vector<1x16x32xf32>
    %18 = vector.shape_cast %17 : vector<1x16x32xf32> to vector<16x32xf32>
    %c2_15 = arith.constant 2 : index
    %c0_16 = arith.constant 0 : index
    %c0_17 = arith.constant 0 : index
    %19 = vector.load %arg3[%c2_15, %c0_16, %c0_17] : memref<3x32x1xf32, #tpu.memory_space<vmem>>, vector<1x16x1xf32>
    %20 = vector.shape_cast %19 : vector<1x16x1xf32> to vector<16x1xf32>
    %cst_18 = arith.constant dense<0.000000e+00> : vector<16x128xf32>
    %21 = tpu.matmul %18, %16, %cst_18 {dimension_numbers = #tpu.dot_dimension_numbers<[1], [0], [0], [1], [0, 0, 1, 1], [], []>} : vector<16x32xf32>, vector<32x128xf32>, vector<16x128xf32> -> vector<16x128xf32>
    %22 = vector.broadcast %20 : vector<16x1xf32> to vector<16x128xf32>
    %23 = arith.addf %21, %22 : vector<16x128xf32>
    %24 = arith.negf %23 : vector<16x128xf32>
    %25 = math.exp %24 : vector<16x128xf32>
    %cst_19 = arith.constant 1.000000e+00 : f32
    %26 = vector.broadcast %cst_19 : f32 to vector<16x128xf32>
    %27 = arith.addf %26, %25 : vector<16x128xf32>
    %28 = arith.divf %26, %27 : vector<16x128xf32>
    %29 = tpu.transpose %28, [1, 0] : vector<16x128xf32> -> vector<128x16xf32>
    %c0_20 = arith.constant 0 : index
    %c0_21 = arith.constant 0 : index
    %30 = vector.load %arg4[%c0_20, %c0_21] : memref<128x16xf32, #tpu.memory_space<vmem>>, vector<128x16xf32>
    tpu.vector_store %arg4[%c0_20, %c0_21], %29 {strides = array<i32>} : memref<128x16xf32, #tpu.memory_space<vmem>>, vector<128x16xf32>,
    return
  }
  func.func @transform_0(%arg0: i32) -> (i32, i32) {
    %c0_i32 = arith.constant 0 : i32
    %c0_i32_0 = arith.constant 0 : i32
    return %arg0, %c0_i32 : i32, i32
  }
  func.func @transform_1(%arg0: i32) -> (i32, i32, i32) {
    %c0_i32 = arith.constant 0 : i32
    %c0_i32_0 = arith.constant 0 : i32
    %c0_i32_1 = arith.constant 0 : i32
    %c0_i32_2 = arith.constant 0 : i32
    return %c0_i32, %c0_i32_0, %c0_i32_1 : i32, i32, i32
  }
  func.func @transform_2(%arg0: i32) -> (i32, i32, i32) {
    %c0_i32 = arith.constant 0 : i32
    %c0_i32_0 = arith.constant 0 : i32
    %c0_i32_1 = arith.constant 0 : i32
    %c0_i32_2 = arith.constant 0 : i32
    return %c0_i32, %c0_i32_0, %c0_i32_1 : i32, i32, i32
  }
  func.func @transform_3(%arg0: i32) -> (i32, i32) {
    %c0_i32 = arith.constant 0 : i32
    %c0_i32_0 = arith.constant 0 : i32
    return %arg0, %c0_i32 : i32, i32
  }
}

</mosaic_0001>

<llo_original>
// kernel: trunknet_forward.1
$region0: #{trunknet_forward.1}
  #allocation0 [shape = 'u32[]', space=smem, size = 0x4, offset = 0x4, fixed_abs, tag = 'smem constant byte address 0x4 - core index']
  #allocation1 [shape = 'u32[144,128]{1,0:T(1,128)}', space=vmem, size = 0x12000, scoped, tag = 'internal scratch']
  %s0 = inlined_call_operand.vmem [shape: f32[128,3], index: 0, kind: input, shape index: {}]
  %s1 = inlined_call_operand.vmem [shape: f32[3,32,32], index: 1, kind: input, shape index: {}]
  %s2 = inlined_call_operand.vmem [shape: f32[3,32,1], index: 2, kind: input, shape index: {}]
  %s3 = inlined_call_operand.vmem [shape: f32[128,16], index: 3, kind: output, shape index: {}]
  %s4 = sld [smem:[#allocation0]]
  $region22: #{trunknet_forward.1} parent=0
    _
  %s6 = ssub.s32 1, %s4
  %s7 = scalar_select 0, %s6, %s4
  // Predicated region
  $region2: #{trunknet_forward.1} parent=0 // pred_check
    _
  $region3: #{trunknet_forward.1} parent=0 // pred_check_branch
    %9 = sbr.rel (0) target = $region5
  $region4: #{trunknet_forward.1} parent=0 // pred_region
    _
  $region5: #{trunknet_forward.1} parent=0 // pred_fallthru
    _
  // Predicated region
  $region6: #{trunknet_forward.1} parent=0 // pred_check
    _
  $region7: #{trunknet_forward.1} parent=0 // pred_check_branch
    %11 = sbr.rel (0) target = $region9
  $region8: #{trunknet_forward.1} parent=0 // pred_region
    _
  $region9: #{trunknet_forward.1} parent=0 // pred_fallthru
    _
  // Predicated region
  $region10: #{trunknet_forward.1} parent=0 // pred_check
    _
  $region11: #{trunknet_forward.1} parent=0 // pred_check_branch
    %13 = sbr.rel (0) target = $region13
  $region12: #{trunknet_forward.1} parent=0 // pred_region
    _
  $region13: #{trunknet_forward.1} parent=0 // pred_fallthru
    _
  %v14 = vld [vmem:[%s1] sm:$0xff]
  %v15 = vld [vmem:[%s1 + $0x8] sm:$0xff]
  %v16 = vld [vmem:[%s1 + $0x10] sm:$0xff]
  %v17 = vld [vmem:[%s1 + $0x18] sm:$0xff]
  %v18 = vld [vmem:[%s2] sm:$0xff]
  %v19 = vld [vmem:[%s2 + $0x8] sm:$0xff]
  %v20 = vld [vmem:[%s2 + $0x10] sm:$0xff]
  %v21 = vld [vmem:[%s2 + $0x18] sm:$0xff]
  %v22 = vld [vmem:[%s0] sm:$0xff]
  %v23 = vld [vmem:[%s0 + $0x8] sm:$0xff]
  %v24 = vld [vmem:[%s0 + $0x10] sm:$0xff]
  %v25 = vld [vmem:[%s0 + $0x18] sm:$0xff]
  %v26 = vld [vmem:[%s0 + $0x20] sm:$0xff]
  %v27 = vld [vmem:[%s0 + $0x28] sm:$0xff]
  %v28 = vld [vmem:[%s0 + $0x30] sm:$0xff]
  %v29 = vld [vmem:[%s0 + $0x38] sm:$0xff]
  %v30 = vld [vmem:[%s0 + $0x40] sm:$0xff]
  %v31 = vld [vmem:[%s0 + $0x48] sm:$0xff]
  %v32 = vld [vmem:[%s0 + $0x50] sm:$0xff]
  %v33 = vld [vmem:[%s0 + $0x58] sm:$0xff]
  %v34 = vld [vmem:[%s0 + $0x60] sm:$0xff]
  %v35 = vld [vmem:[%s0 + $0x68] sm:$0xff]
  %v36 = vld [vmem:[%s0 + $0x70] sm:$0xff]
  %v37 = vld [vmem:[%s0 + $0x78] sm:$0xff]
  %39 = vset.pattern.permute.xlu0 0
  %40 = vperm.xlu0 %39, %v18
  %v41 = vpop.permute.xlu0 %40
  %44 = vset.pattern.permute.xlu0 0
  %45 = vperm.xlu0 %44, %v19
  %v46 = vpop.permute.xlu0 %45
  %49 = vset.pattern.permute.xlu0 0
  %50 = vperm.xlu0 %49, %v20
  %v51 = vpop.permute.xlu0 %50
  %54 = vset.pattern.permute.xlu0 0
  %55 = vperm.xlu0 %54, %v21
  %v56 = vpop.permute.xlu0 %55
  %vm58 = vcmask 23552
  %v60 = vsel %vm58, %v14, 0
  %v63 = vsel %vm58, %v15, 0
  %v66 = vsel %vm58, %v16, 0
  %v69 = vsel %vm58, %v17, 0
  %v72 = vsel %vm58, %v22, 0
  %v75 = vsel %vm58, %v23, 0
  %v78 = vsel %vm58, %v24, 0
  %v81 = vsel %vm58, %v25, 0
  %v84 = vsel %vm58, %v26, 0
  %v87 = vsel %vm58, %v27, 0
  %v90 = vsel %vm58, %v28, 0
  %v93 = vsel %vm58, %v29, 0
  %v96 = vsel %vm58, %v30, 0
  %v99 = vsel %vm58, %v31, 0
  %v102 = vsel %vm58, %v32, 0
  %v105 = vsel %vm58, %v33, 0
  %v108 = vsel %vm58, %v34, 0
  %v111 = vsel %vm58, %v35, 0
  %v114 = vsel %vm58, %v36, 0
  %v117 = vsel %vm58, %v37, 0
  %119 = vmatprep.subr.mxu0 0.0
  %120 = vmatpush1.xpose.msra.mxu0 %v117
  %121 = vmatprep.subr.mxu0 0.0
  %122 = vmatpush1.xpose.msra.mxu0 %v114
  %123 = vmatprep.subr.mxu0 0.0
  %124 = vmatpush1.xpose.msra.mxu0 %v111
  %125 = vmatprep.subr.mxu0 0.0
  %126 = vmatpush1.xpose.msra.mxu0 %v108
  %127 = vmatprep.subr.mxu0 0.0
  %128 = vmatpush1.xpose.msra.mxu0 %v105
  %129 = vmatprep.subr.mxu0 0.0
  %130 = vmatpush1.xpose.msra.mxu0 %v102
  %131 = vmatprep.subr.mxu0 0.0
  %132 = vmatpush1.xpose.msra.mxu0 %v99
  %133 = vmatprep.subr.mxu0 0.0
  %134 = vmatpush1.xpose.msra.mxu0 %v96
  %135 = vmatprep.subr.mxu0 0.0
  %136 = vmatpush1.xpose.msra.mxu0 %v93
  %137 = vmatprep.subr.mxu0 0.0
  %138 = vmatpush1.xpose.msra.mxu0 %v90
  %139 = vmatprep.subr.mxu0 0.0
  %140 = vmatpush1.xpose.msra.mxu0 %v87
  %141 = vmatprep.subr.mxu0 0.0
  %142 = vmatpush1.xpose.msra.mxu0 %v84
  %143 = vmatprep.subr.mxu0 0.0
  %144 = vmatpush1.xpose.msra.mxu0 %v81
  %145 = vmatprep.subr.mxu0 0.0
  %146 = vmatpush1.xpose.msra.mxu0 %v78
  %147 = vmatprep.subr.mxu0 0.0
  %148 = vmatpush1.xpose.msra.mxu0 %v75
  %149 = vmatprep.subr.mxu0 0.0
  %150 = vmatpush1.xpose.msra.mxu0 %v72
  %151 = vmatprep.subr.mxu0 0.0
  %152 = vmatpush2.xpose.msra.mxu0 0.0
  %153 = vmatprep.subr.mxu0 0.0
  %154 = vmatpush2.xpose.msra.mxu0 0.0
  %155 = vmatprep.subr.mxu0 0.0
  %156 = vmatpush2.xpose.msra.mxu0 0.0
  %157 = vmatprep.subr.mxu0 0.0
  %158 = vmatpush2.xpose.msra.mxu0 0.0
  %159 = vmatprep.subr.mxu0 0.0
  %160 = vmatpush2.xpose.msra.mxu0 0.0
  %161 = vmatprep.subr.mxu0 0.0
  %162 = vmatpush2.xpose.msra.mxu0 0.0
  %163 = vmatprep.subr.mxu0 0.0
  %164 = vmatpush2.xpose.msra.mxu0 0.0
  %165 = vmatprep.subr.mxu0 0.0
  %166 = vmatpush2.xpose.msra.mxu0 0.0
  %167 = vmatprep.subr.mxu0 0.0
  %168 = vmatpush2.xpose.msra.mxu0 0.0
  %169 = vmatprep.subr.mxu0 0.0
  %170 = vmatpush2.xpose.msra.mxu0 0.0
  %171 = vmatprep.subr.mxu0 0.0
  %172 = vmatpush2.xpose.msra.mxu0 0.0
  %173 = vmatprep.subr.mxu0 0.0
  %174 = vmatpush2.xpose.msra.mxu0 0.0
  %175 = vmatprep.subr.mxu0 0.0
  %176 = vmatpush2.xpose.msra.mxu0 0.0
  %177 = vmatprep.subr.mxu0 0.0
  %178 = vmatpush2.xpose.msra.mxu0 0.0
  %179 = vmatprep.subr.mxu0 0.0
  %180 = vmatpush2.xpose.msra.mxu0 0.0
  %181 = vmatprep.subr.mxu0 0.0
  %182 = vmatpush2.xpose.msra.mxu0 0.0
  %183 = vmatprep.mubr.f32.mxu0 0.0
  %184 = vmatmul.mubr.f32.gmra.mxu0 %v60
  %v185 = vpop.f32.mrf.mxu0
  %v186 = vadd.f32 %v41, %v185
  %v187 = vpop.f32.mrf.mxu0
  %188 = vmatprep.mubr.f32.mxu0 0.0
  %189 = vmatmul.mubr.f32.gmra.mxu0 %v63
  %v190 = vpop.f32.mrf.mxu0
  %v191 = vadd.f32 %v46, %v190
  %v192 = vpop.f32.mrf.mxu0
  %193 = vmatprep.mubr.f32.mxu0 0.0
  %194 = vmatmul.mubr.f32.gmra.mxu0 %v66
  %v195 = vpop.f32.mrf.mxu0
  %v196 = vadd.f32 %v51, %v195
  %v197 = vpop.f32.mrf.mxu0
  %198 = vmatprep.mubr.f32.mxu0 0.0
  %199 = vmatmul.mubr.f32.gmra.mxu0 %v69
  %v200 = vpop.f32.mrf.mxu0
  %v201 = vadd.f32 %v56, %v200
  %v202 = vpop.f32.mrf.mxu0
  %203 = vdwg.mxu0
  %v204 = vtanh.pop %v186
  %v205 = vtanh.pop %v191
  %v206 = vtanh.pop %v196
  %v207 = vtanh.pop %v201
  %s208 = scalar_lea.vmem %s1, 32
  %v209 = vld [vmem:[%s208] sm:$0xff]
  %v210 = vld [vmem:[%s208 + $0x8] sm:$0xff]
  %v211 = vld [vmem:[%s208 + $0x10] sm:$0xff]
  %v212 = vld [vmem:[%s208 + $0x18] sm:$0xff]
  %s213 = scalar_lea.vmem %s2, 32
  %v214 = vld [vmem:[%s213] sm:$0xff]
  %v215 = vld [vmem:[%s213 + $0x8] sm:$0xff]
  %v216 = vld [vmem:[%s213 + $0x10] sm:$0xff]
  %v217 = vld [vmem:[%s213 + $0x18] sm:$0xff]
  %219 = vset.pattern.permute.xlu0 0
  %220 = vperm.xlu0 %219, %v214
  %v221 = vpop.permute.xlu0 %220
  %224 = vset.pattern.permute.xlu0 0
  %225 = vperm.xlu0 %224, %v215
  %v226 = vpop.permute.xlu0 %225
  %229 = vset.pattern.permute.xlu0 0
  %230 = vperm.xlu0 %229, %v216
  %v231 = vpop.permute.xlu0 %230
  %234 = vset.pattern.permute.xlu0 0
  %235 = vperm.xlu0 %234, %v217
  %v236 = vpop.permute.xlu0 %235
  %vm238 = vcmask 261120
  %v240 = vsel %vm238, %v209, 0
  %v243 = vsel %vm238, %v210, 0
  %v246 = vsel %vm238, %v211, 0
  %v249 = vsel %vm238, %v212, 0
  %251 = vmatprep.subr.mxu0 0.0
  %252 = vmatpush1.msra.mxu0 0.0
  %253 = vmatprep.subr.mxu0 0.0
  %254 = vmatpush1.msra.mxu0 0.0
  %255 = vmatprep.subr.mxu0 0.0
  %256 = vmatpush1.msra.mxu0 0.0
  %257 = vmatprep.subr.mxu0 0.0
  %258 = vmatpush1.msra.mxu0 0.0
  %259 = vmatprep.subr.mxu0 0.0
  %260 = vmatpush1.msra.mxu0 0.0
  %261 = vmatprep.subr.mxu0 0.0
  %262 = vmatpush1.msra.mxu0 0.0
  %263 = vmatprep.subr.mxu0 0.0
  %264 = vmatpush1.msra.mxu0 0.0
  %265 = vmatprep.subr.mxu0 0.0
  %266 = vmatpush1.msra.mxu0 0.0
  %267 = vmatprep.subr.mxu0 0.0
  %268 = vmatpush1.msra.mxu0 0.0
  %269 = vmatprep.subr.mxu0 0.0
  %270 = vmatpush1.msra.mxu0 0.0
  %271 = vmatprep.subr.mxu0 0.0
  %272 = vmatpush1.msra.mxu0 0.0
  %273 = vmatprep.subr.mxu0 0.0
  %274 = vmatpush1.msra.mxu0 0.0
  %275 = vmatprep.subr.mxu0 0.0
  %276 = vmatpush1.msra.mxu0 %v207
  %277 = vmatprep.subr.mxu0 0.0
  %278 = vmatpush1.msra.mxu0 %v206
  %279 = vmatprep.subr.mxu0 0.0
  %280 = vmatpush1.msra.mxu0 %v205
  %281 = vmatprep.subr.mxu0 0.0
  %282 = vmatpush1.msra.mxu0 %v204
  %283 = vmatprep.subr.mxu0 0.0
  %284 = vmatpush2.msra.mxu0 0.0
  %285 = vmatprep.subr.mxu0 0.0
  %286 = vmatpush2.msra.mxu0 0.0
  %287 = vmatprep.subr.mxu0 0.0
  %288 = vmatpush2.msra.mxu0 0.0
  %289 = vmatprep.subr.mxu0 0.0
  %290 = vmatpush2.msra.mxu0 0.0
  %291 = vmatprep.subr.mxu0 0.0
  %292 = vmatpush2.msra.mxu0 0.0
  %293 = vmatprep.subr.mxu0 0.0
  %294 = vmatpush2.msra.mxu0 0.0
  %295 = vmatprep.subr.mxu0 0.0
  %296 = vmatpush2.msra.mxu0 0.0
  %297 = vmatprep.subr.mxu0 0.0
  %298 = vmatpush2.msra.mxu0 0.0
  %299 = vmatprep.subr.mxu0 0.0
  %300 = vmatpush2.msra.mxu0 0.0
  %301 = vmatprep.subr.mxu0 0.0
  %302 = vmatpush2.msra.mxu0 0.0
  %303 = vmatprep.subr.mxu0 0.0
  %304 = vmatpush2.msra.mxu0 0.0
  %305 = vmatprep.subr.mxu0 0.0
  %306 = vmatpush2.msra.mxu0 0.0
  %307 = vmatprep.subr.mxu0 0.0
  %308 = vmatpush2.msra.mxu0 0.0
  %309 = vmatprep.subr.mxu0 0.0
  %310 = vmatpush2.msra.mxu0 0.0
  %311 = vmatprep.subr.mxu0 0.0
  %312 = vmatpush2.msra.mxu0 0.0
  %313 = vmatprep.subr.mxu0 0.0
  %314 = vmatpush2.msra.mxu0 0.0
  %315 = vmatprep.mubr.f32.mxu0 0.0
  %316 = vmatmul.mubr.f32.gmra.mxu0 %v240
  %v317 = vpop.f32.mrf.mxu0
  %v318 = vadd.f32 %v221, %v317
  %v319 = vpop.f32.mrf.mxu0
  %320 = vmatprep.mubr.f32.mxu0 0.0
  %321 = vmatmul.mubr.f32.gmra.mxu0 %v243
  %v322 = vpop.f32.mrf.mxu0
  %v323 = vadd.f32 %v226, %v322
  %v324 = vpop.f32.mrf.mxu0
  %325 = vmatprep.mubr.f32.mxu0 0.0
  %326 = vmatmul.mubr.f32.gmra.mxu0 %v246
  %v327 = vpop.f32.mrf.mxu0
  %v328 = vadd.f32 %v231, %v327
  %v329 = vpop.f32.mrf.mxu0
  %330 = vmatprep.mubr.f32.mxu0 0.0
  %331 = vmatmul.mubr.f32.gmra.mxu0 %v249
  %v332 = vpop.f32.mrf.mxu0
  %v333 = vadd.f32 %v236, %v332
  %v334 = vpop.f32.mrf.mxu0
  %335 = vdwg.mxu0
  %v336 = vtanh.pop %v318
  %v337 = vtanh.pop %v323
  %v338 = vtanh.pop %v328
  %v339 = vtanh.pop %v333
  %s340 = scalar_lea.vmem %s1, 64
  %v341 = vld [vmem:[%s340] sm:$0xff]
  %v342 = vld [vmem:[%s340 + $0x8] sm:$0xff]
  %s343 = scalar_lea.vmem %s2, 64
  %v344 = vld [vmem:[%s343] sm:$0xff]
  %v345 = vld [vmem:[%s343 + $0x8] sm:$0xff]
  %347 = vset.pattern.permute.xlu0 0
  %348 = vperm.xlu0 %347, %v344
  %v349 = vpop.permute.xlu0 %348
  %352 = vset.pattern.permute.xlu0 0
  %353 = vperm.xlu0 %352, %v345
  %v354 = vpop.permute.xlu0 %353
  %v357 = vsel %vm238, %v341, 0
  %v360 = vsel %vm238, %v342, 0
  %362 = vmatprep.subr.mxu0 0.0
  %363 = vmatpush1.msra.mxu0 0.0
  %364 = vmatprep.subr.mxu0 0.0
  %365 = vmatpush1.msra.mxu0 0.0
  %366 = vmatprep.subr.mxu0 0.0
  %367 = vmatpush1.msra.mxu0 0.0
  %368 = vmatprep.subr.mxu0 0.0
  %369 = vmatpush1.msra.mxu0 0.0
  %370 = vmatprep.subr.mxu0 0.0
  %371 = vmatpush1.msra.mxu0 0.0
  %372 = vmatprep.subr.mxu0 0.0
  %373 = vmatpush1.msra.mxu0 0.0
  %374 = vmatprep.subr.mxu0 0.0
  %375 = vmatpush1.msra.mxu0 0.0
  %376 = vmatprep.subr.mxu0 0.0
  %377 = vmatpush1.msra.mxu0 0.0
  %378 = vmatprep.subr.mxu0 0.0
  %379 = vmatpush1.msra.mxu0 0.0
  %380 = vmatprep.subr.mxu0 0.0
  %381 = vmatpush1.msra.mxu0 0.0
  %382 = vmatprep.subr.mxu0 0.0
  %383 = vmatpush1.msra.mxu0 0.0
  %384 = vmatprep.subr.mxu0 0.0
  %385 = vmatpush1.msra.mxu0 0.0
  %386 = vmatprep.subr.mxu0 0.0
  %387 = vmatpush1.msra.mxu0 %v339
  %388 = vmatprep.subr.mxu0 0.0
  %389 = vmatpush1.msra.mxu0 %v338
  %390 = vmatprep.subr.mxu0 0.0
  %391 = vmatpush1.msra.mxu0 %v337
  %392 = vmatprep.subr.mxu0 0.0
  %393 = vmatpush1.msra.mxu0 %v336
  %394 = vmatprep.subr.mxu0 0.0
  %395 = vmatpush2.msra.mxu0 0.0
  %396 = vmatprep.subr.mxu0 0.0
  %397 = vmatpush2.msra.mxu0 0.0
  %398 = vmatprep.subr.mxu0 0.0
  %399 = vmatpush2.msra.mxu0 0.0
  %400 = vmatprep.subr.mxu0 0.0
  %401 = vmatpush2.msra.mxu0 0.0
  %402 = vmatprep.subr.mxu0 0.0
  %403 = vmatpush2.msra.mxu0 0.0
  %404 = vmatprep.subr.mxu0 0.0
  %405 = vmatpush2.msra.mxu0 0.0
  %406 = vmatprep.subr.mxu0 0.0
  %407 = vmatpush2.msra.mxu0 0.0
  %408 = vmatprep.subr.mxu0 0.0
  %409 = vmatpush2.msra.mxu0 0.0
  %410 = vmatprep.subr.mxu0 0.0
  %411 = vmatpush2.msra.mxu0 0.0
  %412 = vmatprep.subr.mxu0 0.0
  %413 = vmatpush2.msra.mxu0 0.0
  %414 = vmatprep.subr.mxu0 0.0
  %415 = vmatpush2.msra.mxu0 0.0
  %416 = vmatprep.subr.mxu0 0.0
  %417 = vmatpush2.msra.mxu0 0.0
  %418 = vmatprep.subr.mxu0 0.0
  %419 = vmatpush2.msra.mxu0 0.0
  %420 = vmatprep.subr.mxu0 0.0
  %421 = vmatpush2.msra.mxu0 0.0
  %422 = vmatprep.subr.mxu0 0.0
  %423 = vmatpush2.msra.mxu0 0.0
  %424 = vmatprep.subr.mxu0 0.0
  %425 = vmatpush2.msra.mxu0 0.0
  %426 = vmatprep.mubr.f32.mxu0 0.0
  %427 = vmatmul.mubr.f32.gmra.mxu0 %v357
  %v428 = vpop.f32.mrf.mxu0
  %v429 = vadd.f32 %v349, %v428
  %v430 = vpop.f32.mrf.mxu0
  %431 = vmatprep.mubr.f32.mxu0 0.0
  %432 = vmatmul.mubr.f32.gmra.mxu0 %v360
  %v433 = vpop.f32.mrf.mxu0
  %v434 = vadd.f32 %v354, %v433
  %v435 = vpop.f32.mrf.mxu0
  %436 = vdwg.mxu0
  %v437 = vxor.u32 %v429, 2147483648
  %v438 = vxor.u32 %v434, 2147483648
  %v439 = vmul.f32 %v437, 1.442695
  %v440 = vpow.pop %v439
  %v441 = vmul.f32 %v438, 1.442695
  %v442 = vpow.pop %v441
  %v443 = vadd.f32 %v440, 1.0
  %v444 = vadd.f32 %v442, 1.0
  %v445 = vrcp.pop %v443
  %v446 = vmul.f32 1.0, %v445
  %v447 = vrcp.pop %v444
  %v448 = vmul.f32 1.0, %v447
  %449 = vxpose.xlu0.b32.start [1/16] %v446, 128
  %450 = vxpose.xlu0.b32.cont [2/16] %v448, 128
  %451 = vxpose.xlu0.b32.cont [3/16] 0.0, 128
  %452 = vxpose.xlu0.b32.cont [4/16] 0.0, 128
  %453 = vxpose.xlu0.b32.cont [5/16] 0.0, 128
  %454 = vxpose.xlu0.b32.cont [6/16] 0.0, 128
  %455 = vxpose.xlu0.b32.cont [7/16] 0.0, 128
  %456 = vxpose.xlu0.b32.cont [8/16] 0.0, 128
  %457 = vxpose.xlu0.b32.cont [9/16] 0.0, 128
  %458 = vxpose.xlu0.b32.cont [10/16] 0.0, 128
  %459 = vxpose.xlu0.b32.cont [11/16] 0.0, 128
  %460 = vxpose.xlu0.b32.cont [12/16] 0.0, 128
  %461 = vxpose.xlu0.b32.cont [13/16] 0.0, 128
  %462 = vxpose.xlu0.b32.cont [14/16] 0.0, 128
  %463 = vxpose.xlu0.b32.cont [15/16] 0.0, 128
  %464 = vxpose.xlu0.b32.end [16/16] 0.0, 128
  %v465 = vpop.trf.xlu0
  %v466 = vpop.trf.xlu0
  %v467 = vpop.trf.xlu0
  %v468 = vpop.trf.xlu0
  %v469 = vpop.trf.xlu0
  %v470 = vpop.trf.xlu0
  %v471 = vpop.trf.xlu0
  %v472 = vpop.trf.xlu0
  %v473 = vpop.trf.xlu0
  %v474 = vpop.trf.xlu0
  %v475 = vpop.trf.xlu0
  %v476 = vpop.trf.xlu0
  %v477 = vpop.trf.xlu0
  %v478 = vpop.trf.xlu0
  %v479 = vpop.trf.xlu0
  %v480 = vpop.trf.xlu0
  %vm481 = vcmask 130048
  %482 = vst.msk [vmem:[%s3] sm:$0xff] %vm481, %v465
  %483 = vst.msk [vmem:[%s3 + $0x8] sm:$0xff] %vm481, %v466
  %484 = vst.msk [vmem:[%s3 + $0x10] sm:$0xff] %vm481, %v467
  %485 = vst.msk [vmem:[%s3 + $0x18] sm:$0xff] %vm481, %v468
  %486 = vst.msk [vmem:[%s3 + $0x20] sm:$0xff] %vm481, %v469
  %487 = vst.msk [vmem:[%s3 + $0x28] sm:$0xff] %vm481, %v470
  %488 = vst.msk [vmem:[%s3 + $0x30] sm:$0xff] %vm481, %v471
  %489 = vst.msk [vmem:[%s3 + $0x38] sm:$0xff] %vm481, %v472
  %490 = vst.msk [vmem:[%s3 + $0x40] sm:$0xff] %vm481, %v473
  %491 = vst.msk [vmem:[%s3 + $0x48] sm:$0xff] %vm481, %v474
  %492 = vst.msk [vmem:[%s3 + $0x50] sm:$0xff] %vm481, %v475
  %493 = vst.msk [vmem:[%s3 + $0x58] sm:$0xff] %vm481, %v476
  %494 = vst.msk [vmem:[%s3 + $0x60] sm:$0xff] %vm481, %v477
  %495 = vst.msk [vmem:[%s3 + $0x68] sm:$0xff] %vm481, %v478
  %496 = vst.msk [vmem:[%s3 + $0x70] sm:$0xff] %vm481, %v479
  %497 = vst.msk [vmem:[%s3 + $0x78] sm:$0xff] %vm481, %v480
  // Predicated region
  $region14: #{trunknet_forward.1} parent=0 // pred_check
    _
  $region15: #{trunknet_forward.1} parent=0 // pred_check_branch
    %499 = sbr.rel (0) target = $region17
  $region16: #{trunknet_forward.1} parent=0 // pred_region
    _
  $region17: #{trunknet_forward.1} parent=0 // pred_fallthru
    _
  // Predicated region
  $region18: #{trunknet_forward.1} parent=0 // pred_check
    _
  $region19: #{trunknet_forward.1} parent=0 // pred_check_branch
    %501 = sbr.rel (0) target = $region21
  $region20: #{trunknet_forward.1} parent=0 // pred_region
    _
  $region21: #{trunknet_forward.1} parent=0 // pred_fallthru
    _

</llo_original>
